<compile_context>
chip_gen: v7x
topology: tpu7x:2x2x1
jax: 0.10.0
libtpu: 0.0.40
codegen_flags: <defaults>
</compile_context>

<pallas_src>
import jax
import jax.numpy as jnp
from jax import lax
from jax.experimental import pallas as pl
from jax.experimental.pallas import tpu as pltpu

_MAX_TL = 65536            # length-tile (lane axis); multiple of 128
_TARGET_STEP_BYTES = 4 << 20   # aim for ~4 MiB of HBM traffic per grid step
_MAX_TB = 64               # cap on in-kernel batch loop length


def _dense_kernel(x_ref, w_ref, b_ref, o_ref):
    # x_ref: (TB, C_in, TL), w_ref: (C_out, C_in), b_ref: (C_out, 1),
    # o_ref: (TB, C_out, TL)
    w = w_ref[...]                # (C_out, C_in) -- resident in VMEM
    b = b_ref[...]                # (C_out, 1)
    tb = x_ref.shape[0]

    def one_batch(i):
        x = x_ref[i]              # (C_in, TL)  -- lane-dense
        y = jnp.dot(w, x, preferred_element_type=jnp.float32) + b   # MXU
        o_ref[i] = jnp.tanh(y).astype(o_ref.dtype)                  # EUP

    if tb == 1:
        one_batch(0)
    else:
        def body(i, carry):
            one_batch(i)
            return carry
        lax.fori_loop(0, tb, body, 0)


def dense_forward(z, weight, bias):
    """z: (N, C_in, L) float32. weight: (C_out, C_in, 1). bias: (C_out,).

    Returns (N, C_out, L) float32, equivalent to
    torch.tanh(nn.functional.conv1d(z, weight, bias)).
    """
    n, c_in, length = z.shape
    c_out = weight.shape[0]

    w2d = weight[:, :, 0]            # (C_out, C_in)
    b2d = bias.reshape(c_out, 1)     # (C_out, 1)

    # Length tile: full L if it fits, else a 128-multiple tile (tail blocks are
    # safe: each output column depends only on its own input column, and Pallas
    # masks the out-of-bounds portion of the final store).
    tl = length if length <= _MAX_TL else _MAX_TL

    # Batch tile: fold batches when the per-batch tile is small so each grid
    # step still moves a few MiB (amortizes the fixed per-step overhead).
    per_batch_bytes = 4 * (c_in + c_out) * tl
    tb = max(1, min(n, _TARGET_STEP_BYTES // per_batch_bytes, _MAX_TB))

    gb = pl.cdiv(n, tb)
    gl = pl.cdiv(length, tl)

    # Put the larger parallel axis outermost so the megacore split is balanced.
    if gl >= gb:
        grid = (gl, gb)
        xo_map = lambda l, b: (b, 0, l)
    else:
        grid = (gb, gl)
        xo_map = lambda b, l: (b, 0, l)
    const_map = lambda *_: (0, 0)

    # VMEM budget: double-buffered in+out tiles plus slack for weights/bias.
    in_tile_bytes = 4 * tb * c_in * tl
    out_tile_bytes = 4 * tb * c_out * tl
    vmem_limit = 2 * (in_tile_bytes + out_tile_bytes) + (2 << 20)
    vmem_limit = max(16 << 20, min(vmem_limit, 48 << 20))

    cost = pl.CostEstimate(
        flops=2 * n * length * c_in * c_out,
        transcendentals=n * length * c_out,
        bytes_accessed=4 * (n * c_in * length + n * c_out * length
                            + c_in * c_out + c_out),
    )

    return pl.pallas_call(
        _dense_kernel,
        out_shape=jax.ShapeDtypeStruct((n, c_out, length), jnp.float32),
        grid_spec=pltpu.PrefetchScalarGridSpec(
            num_scalar_prefetch=0,
            grid=grid,
            in_specs=[
                pl.BlockSpec((tb, c_in, tl), xo_map),
                pl.BlockSpec((c_out, c_in), const_map),   # resident weights
                pl.BlockSpec((c_out, 1), const_map),      # resident bias
            ],
            out_specs=pl.BlockSpec((tb, c_out, tl), xo_map),
        ),
        compiler_params=pltpu.CompilerParams(
            dimension_semantics=("parallel", "parallel"),
            vmem_limit_bytes=vmem_limit,
        ),
        cost_estimate=cost,
    )(z, w2d, b2d)


def init_dense_params(key, in_channels=12, num_classes=6, kernel_size=1):
    # xavier_uniform_ on Conv1d weight (out, in, k): fan_in = in*k, fan_out = out*k
    fan_in = in_channels * kernel_size
    fan_out = num_classes * kernel_size
    bound = (6.0 / (fan_in + fan_out)) ** 0.5
    weight = jax.random.uniform(
        key, (num_classes, in_channels, kernel_size),
        minval=-bound, maxval=bound, dtype=jnp.float32)
    bias = jnp.zeros((num_classes,), dtype=jnp.float32)
    return weight, bias


def _reference(z, weight, bias):
    return jnp.tanh(
        jnp.einsum("ncl,oc->nol", z, weight[:, :, 0]) + bias[None, :, None])


if __name__ == "__main__":
    in_channels = 12
    num_classes = 6

    key = jax.random.PRNGKey(0)
    k_w, k_x1, k_x2 = jax.random.split(key, 3)

    weight, bias = init_dense_params(k_w, in_channels, num_classes, kernel_size=1)

    # Case 1: small, lane-aligned length (tb folds both batch rows into one step).
    z1 = jax.random.normal(k_x1, (2, in_channels, 256), dtype=jnp.float32)
    out1 = jax.block_until_ready(dense_forward(z1, weight, bias))
    assert out1.shape == (2, num_classes, 256)
    assert jnp.allclose(out1, _reference(z1, weight, bias), atol=1e-5, rtol=1e-5)

    # Case 2: non-128-multiple length + odd batch (exercises batch-tile tail mask).
    z2 = jax.random.normal(k_x2, (3, in_channels, 3000), dtype=jnp.float32)
    out2 = jax.block_until_ready(dense_forward(z2, weight, bias))
    assert out2.shape == (3, num_classes, 3000)
    assert jnp.allclose(out2, _reference(z2, weight, bias), atol=1e-5, rtol=1e-5)

    print("KERNEL_OK")
</pallas_src>

<mosaic_0001>
module attributes {stable_mosaic.version = 11 : i64} {
  func.func @_dense_kernel(%arg0: i32, %arg1: i32, %arg2: memref<2x12x256xf32, #tpu.memory_space<vmem>>, %arg3: memref<6x12xf32, #tpu.memory_space<vmem>>, %arg4: memref<6x1xf32, #tpu.memory_space<vmem>>, %arg5: memref<2x6x256xf32, #tpu.memory_space<vmem>>) attributes {dimension_semantics = [#tpu.dimension_semantics<parallel>, #tpu.dimension_semantics<parallel>], iteration_bounds = array<i64: 1, 1>, scalar_prefetch = 0 : i64, scratch_operands = 0 : i64, tpu.core_type = #tpu.core_type<tc>, window_params = [{transform_indices = @transform_0, window_bounds = array<i64: 2, 12, 256>}, {pipeline_mode = #tpu.pipeline_mode<synchronous>, transform_indices = @transform_1, window_bounds = array<i64: 6, 12>}, {pipeline_mode = #tpu.pipeline_mode<synchronous>, transform_indices = @transform_2, window_bounds = array<i64: 6, 1>}, {transform_indices = @transform_3, window_bounds = array<i64: 2, 6, 256>}]} {
    %c0 = arith.constant 0 : index
    %c0_0 = arith.constant 0 : index
    %0 = vector.load %arg3[%c0, %c0_0] : memref<6x12xf32, #tpu.memory_space<vmem>>, vector<6x12xf32>
    %c0_1 = arith.constant 0 : index
    %c0_2 = arith.constant 0 : index
    %1 = vector.load %arg4[%c0_1, %c0_2] : memref<6x1xf32, #tpu.memory_space<vmem>>, vector<6x1xf32>
    %c0_i32 = arith.constant 0 : i32
    %c2_i32 = arith.constant 2 : i32
    %2 = arith.addi %c0_i32, %c2_i32 : i32
    %c1_i32 = arith.constant 1 : i32
    scf.for %arg6 = %c0_i32 to %2 step %c1_i32  : i32 {
      %3 = arith.index_cast %arg6 : i32 to index
      %c0_4 = arith.constant 0 : index
      %c0_5 = arith.constant 0 : index
      %4 = vector.load %arg2[%3, %c0_4, %c0_5] : memref<2x12x256xf32, #tpu.memory_space<vmem>>, vector<1x12x256xf32>
      %5 = vector.shape_cast %4 : vector<1x12x256xf32> to vector<12x256xf32>
      %cst = arith.constant dense<0.000000e+00> : vector<6x256xf32>
      %6 = tpu.matmul %0, %5, %cst {dimension_numbers = #tpu.dot_dimension_numbers<[1], [0], [0], [1], [0, 0, 1, 1], [], []>} : vector<6x12xf32>, vector<12x256xf32>, vector<6x256xf32> -> vector<6x256xf32>
      %7 = vector.broadcast %1 : vector<6x1xf32> to vector<6x256xf32>
      %8 = arith.addf %6, %7 : vector<6x256xf32>
      %9 = math.tanh %8 : vector<6x256xf32>
      %10 = arith.index_cast %arg6 : i32 to index
      %c0_6 = arith.constant 0 : index
      %c0_7 = arith.constant 0 : index
      %11 = vector.load %arg5[%10, %c0_6, %c0_7] : memref<2x6x256xf32, #tpu.memory_space<vmem>>, vector<1x6x256xf32>
      %12 = vector.shape_cast %11 : vector<1x6x256xf32> to vector<6x256xf32>
      %13 = vector.shape_cast %9 : vector<6x256xf32> to vector<1x6x256xf32>
      tpu.vector_store %arg5[%10, %c0_6, %c0_7], %13 {strides = array<i32>} : memref<2x6x256xf32, #tpu.memory_space<vmem>>, vector<1x6x256xf32>,
    }
    %c2_i32_3 = arith.constant 2 : i32
    return
  }
  func.func @transform_0(%arg0: i32, %arg1: i32) -> (i32, i32, i32) {
    %c0_i32 = arith.constant 0 : i32
    %c0_i32_0 = arith.constant 0 : i32
    return %arg1, %c0_i32, %arg0 : i32, i32, i32
  }
  func.func @transform_1(%arg0: i32, %arg1: i32) -> (i32, i32) {
    %c0_i32 = arith.constant 0 : i32
    %c0_i32_0 = arith.constant 0 : i32
    %c0_i32_1 = arith.constant 0 : i32
    return %c0_i32, %c0_i32_0 : i32, i32
  }
  func.func @transform_2(%arg0: i32, %arg1: i32) -> (i32, i32) {
    %c0_i32 = arith.constant 0 : i32
    %c0_i32_0 = arith.constant 0 : i32
    %c0_i32_1 = arith.constant 0 : i32
    return %c0_i32, %c0_i32_0 : i32, i32
  }
  func.func @transform_3(%arg0: i32, %arg1: i32) -> (i32, i32, i32) {
    %c0_i32 = arith.constant 0 : i32
    %c0_i32_0 = arith.constant 0 : i32
    return %arg1, %c0_i32, %arg0 : i32, i32, i32
  }
}

</mosaic_0001>

<llo_original>
// kernel: tpu_custom_call.1
$region0: #{tpu_custom_call.1}
  #allocation0 [shape = 'u32[]', space=smem, size = 0x4, offset = 0x4, fixed_abs, tag = 'smem constant byte address 0x4 - core index']
  #allocation1 [shape = 'u32[144,128]{1,0:T(1,128)}', space=vmem, size = 0x12000, scoped, tag = 'internal scratch']
  %s0 = inlined_call_operand.vmem [shape: f32[2,12,256], index: 0, kind: input, shape index: {}]
  %s1 = inlined_call_operand.vmem [shape: f32[6,12], index: 1, kind: input, shape index: {}]
  %s2 = inlined_call_operand.vmem [shape: f32[6,1], index: 2, kind: input, shape index: {}]
  %s3 = inlined_call_operand.vmem [shape: f32[2,6,256], index: 3, kind: output, shape index: {}]
  %s4 = sld [smem:[#allocation0]]
  $region29: #{tpu_custom_call.1} parent=0
    _
  %s6 = ssub.s32 1, %s4
  %s7 = scalar_select 0, %s6, %s4
  // Predicated region
  $region2: #{tpu_custom_call.1} parent=0 // pred_check
    _
  $region3: #{tpu_custom_call.1} parent=0 // pred_check_branch
    %9 = sbr.rel (0) target = $region5
  $region4: #{tpu_custom_call.1} parent=0 // pred_region
    _
  $region5: #{tpu_custom_call.1} parent=0 // pred_fallthru
    _
  // Predicated region
  $region6: #{tpu_custom_call.1} parent=0 // pred_check
    _
  $region7: #{tpu_custom_call.1} parent=0 // pred_check_branch
    %11 = sbr.rel (0) target = $region9
  $region8: #{tpu_custom_call.1} parent=0 // pred_region
    _
  $region9: #{tpu_custom_call.1} parent=0 // pred_fallthru
    _
  // Predicated region
  $region10: #{tpu_custom_call.1} parent=0 // pred_check
    _
  $region11: #{tpu_custom_call.1} parent=0 // pred_check_branch
    %13 = sbr.rel (0) target = $region13
  $region12: #{tpu_custom_call.1} parent=0 // pred_region
    _
  $region13: #{tpu_custom_call.1} parent=0 // pred_fallthru
    _
  %v14 = vld [vmem:[%s1] sm:$0x3f]
  %v15 = vld [vmem:[%s2] sm:$0x3f]
  loop: start=0, step=1, limit=2
  $region14: #{tpu_custom_call.1} parent=0 // loop_pre_header
    _
  $region15: #{tpu_custom_call.1} parent=0 // loop_header
    %s17 = sphi 0, %s21
    %p18 = scmp.ge.s32.totalorder %s17, 2
  $region16: #{tpu_custom_call.1} parent=0 // loop_header_branch
    %20 = sbr.rel (%p18) target = $region20
  $region17: #{tpu_custom_call.1} parent=0 // loop_body
    %s22 = smul.u32 %s17, 4
    %s23 = smul.addr %s22, 8
    %s24 = scalar_lea.vmem %s0, %s23
    %v25 = vld [vmem:[%s24] sm:$0xff]
    %v26 = vld [vmem:[%s24 + $0x8] sm:$0xff]
    %v27 = vld [vmem:[%s24 + $0x10] sm:$0xf]
    %v28 = vld [vmem:[%s24 + $0x18] sm:$0xf]
    %30 = vset.pattern.permute.xlu0 0
    %31 = vperm.xlu0 %30, %v15
    %v32 = vpop.permute.xlu0 %31
    %vm34 = vcmask 97280
    %v36 = vsel %vm34, %v14, 0
    %vm38 = vcmask 1043456
    %v40 = vsel %vm38, %v27, 0
    %v43 = vsel %vm38, %v28, 0
    %45 = vmatprep.subr.mxu0 %v26
    %46 = vmatpush1.msra.mxu0 %v25
    %47 = vmatprep.subr.mxu0 %v43
    %48 = vmatpush1.msra.mxu0 %v40
    %49 = vmatprep.subr.mxu0 0.0
    %50 = vmatpush1.msra.mxu0 0.0
    %51 = vmatprep.subr.mxu0 0.0
    %52 = vmatpush1.msra.mxu0 0.0
    %53 = vmatprep.subr.mxu0 0.0
    %54 = vmatpush1.msra.mxu0 0.0
    %55 = vmatprep.subr.mxu0 0.0
    %56 = vmatpush1.msra.mxu0 0.0
    %57 = vmatprep.subr.mxu0 0.0
    %58 = vmatpush1.msra.mxu0 0.0
    %59 = vmatprep.subr.mxu0 0.0
    %60 = vmatpush1.msra.mxu0 0.0
    %61 = vmatprep.subr.mxu0 0.0
    %62 = vmatpush1.msra.mxu0 0.0
    %63 = vmatprep.subr.mxu0 0.0
    %64 = vmatpush1.msra.mxu0 0.0
    %65 = vmatprep.subr.mxu0 0.0
    %66 = vmatpush1.msra.mxu0 0.0
    %67 = vmatprep.subr.mxu0 0.0
    %68 = vmatpush1.msra.mxu0 0.0
    %69 = vmatprep.subr.mxu0 0.0
    %70 = vmatpush1.msra.mxu0 0.0
    %71 = vmatprep.subr.mxu0 0.0
    %72 = vmatpush1.msra.mxu0 0.0
    %73 = vmatprep.subr.mxu0 0.0
    %74 = vmatpush1.msra.mxu0 0.0
    %75 = vmatprep.subr.mxu0 0.0
    %76 = vmatpush1.msra.mxu0 0.0
    %77 = vmatprep.subr.mxu0 0.0
    %78 = vmatpush1.msra.mxu0 0.0
    %79 = vmatprep.subr.mxu0 0.0
    %80 = vmatpush1.msra.mxu0 0.0
    %81 = vmatprep.subr.mxu0 0.0
    %82 = vmatpush1.msra.mxu0 0.0
    %83 = vmatprep.subr.mxu0 0.0
    %84 = vmatpush1.msra.mxu0 0.0
    %85 = vmatprep.subr.mxu0 0.0
    %86 = vmatpush1.msra.mxu0 0.0
    %87 = vmatprep.subr.mxu0 0.0
    %88 = vmatpush1.msra.mxu0 0.0
    %89 = vmatprep.subr.mxu0 0.0
    %90 = vmatpush1.msra.mxu0 0.0
    %91 = vmatprep.subr.mxu0 0.0
    %92 = vmatpush1.msra.mxu0 0.0
    %93 = vmatprep.subr.mxu0 0.0
    %94 = vmatpush1.msra.mxu0 0.0
    %95 = vmatprep.subr.mxu0 0.0
    %96 = vmatpush1.msra.mxu0 0.0
    %97 = vmatprep.subr.mxu0 0.0
    %98 = vmatpush1.msra.mxu0 0.0
    %99 = vmatprep.subr.mxu0 0.0
    %100 = vmatpush1.msra.mxu0 0.0
    %101 = vmatprep.subr.mxu0 0.0
    %102 = vmatpush1.msra.mxu0 0.0
    %103 = vmatprep.subr.mxu0 0.0
    %104 = vmatpush1.msra.mxu0 0.0
    %105 = vmatprep.subr.mxu0 0.0
    %106 = vmatpush1.msra.mxu0 0.0
    %107 = vmatprep.subr.mxu0 0.0
    %108 = vmatpush1.msra.mxu0 0.0
    %109 = vmatprep.mubr.f32.mxu0 0.0
    %110 = vmatmul.mubr.f32.gmra.mrb[0].mxu0 %v36
    %v111 = vpop.f32.mrb[0].mxu0
    %v112 = vadd.f32 %v32, %v111
    %v113 = vpop.f32.mrb[0].mxu0
    %v114 = vadd.f32 %v32, %v113
    %115 = vdwg.mxu0
    %v116 = vtanh.pop %v112
    %v117 = vtanh.pop %v114
    %s118 = smul.u32 %s17, 2
    %s119 = smul.addr %s118, 8
    %s120 = scalar_lea.vmem %s3, %s119
    %121 = vst [vmem:[%s120] sm:$0x3f] %v116
    %122 = vst [vmem:[%s120 + $0x8] sm:$0x3f] %v117
  $region18: #{tpu_custom_call.1} parent=0 // loop_footer
    %s21 = sadd.s32 1, %s17
  $region19: #{tpu_custom_call.1} parent=0 // loop_footer_branch
    %16 = sbr.rel target = $region15
  $region20: #{tpu_custom_call.1} parent=0 // loop_exit
    _
  // Predicated region
  $region21: #{tpu_custom_call.1} parent=0 // pred_check
    _
  $region22: #{tpu_custom_call.1} parent=0 // pred_check_branch
    %124 = sbr.rel (0) target = $region24
  $region23: #{tpu_custom_call.1} parent=0 // pred_region
    _
  $region24: #{tpu_custom_call.1} parent=0 // pred_fallthru
    _
  // Predicated region
  $region25: #{tpu_custom_call.1} parent=0 // pred_check
    _
  $region26: #{tpu_custom_call.1} parent=0 // pred_check_branch
    %126 = sbr.rel (0) target = $region28
  $region27: #{tpu_custom_call.1} parent=0 // pred_region
    _
  $region28: #{tpu_custom_call.1} parent=0 // pred_fallthru
    _

</llo_original>
